<compile_context>
chip_gen: v6e
topology: v6e:2x2x1
jax: 0.10.0
libtpu: 0.0.40
codegen_flags: <defaults>
</compile_context>

<pallas_src>
import functools

import jax
import jax.numpy as jnp
from jax.experimental import pallas as pl
from jax.experimental.pallas import tpu as pltpu


def _consist_kernel(yf_ref, yg_ref, o_ref, acc_ref, *,
                    total_steps, nb, n_items, skip_elems, acc_fold):
    p = pl.program_id(0)          # partials (parallel) axis
    i = pl.program_id(1)          # reduction axis over batch-item blocks
    spp = pl.num_programs(1)

    @pl.when(i == 0)
    def _init():
        acc_ref[...] = jnp.zeros_like(acc_ref)

    step = p * spp + i            # global block counter; tail steps may be padding

    @pl.when(step < total_steps)
    def _accumulate():
        blk = yf_ref.shape        # (nb, rows_per_item, L)
        lanes = blk[-1]
        d = yf_ref[...].astype(jnp.float32) - yg_ref[...].astype(jnp.float32)
        # Row-major flat offset inside each batch item; channel 0 is the first
        # H*W elements.  Also drop batch rows beyond N in a partial tail block.
        # Pure VPU work -> free in this HBM-bound kernel.
        row = jax.lax.broadcasted_iota(jnp.int32, blk, 1)
        lane = jax.lax.broadcasted_iota(jnp.int32, blk, 2)
        bidx = jax.lax.broadcasted_iota(jnp.int32, blk, 0)
        keep = (row * lanes + lane >= skip_elems) & (step * nb + bidx < n_items)
        sq = jnp.where(keep, d * d, 0.0)   # select: OOB garbage / NaN never leaks
        if acc_fold:
            # VALU-only sublane-group adds into a tiny (8, L) accumulator.
            acc_ref[...] += sq.reshape(-1, 8, lanes).sum(axis=0)
        else:
            acc_ref[...] += sq.sum(axis=0)

    @pl.when(i == spp - 1)
    def _finalize():
        # Single cross-lane reduce per partial; lane-dense (8,128) output block.
        o_ref[...] = jnp.full(o_ref.shape, jnp.sum(acc_ref[...]), dtype=o_ref.dtype)


def _device_kind():
    try:
        return jax.devices()[0].device_kind.lower()
    except Exception:
        return ""


def _vmem_capacity_bytes():
    try:
        cap = getattr(pltpu.get_tpu_info(), "vmem_capacity_bytes", None)
        if cap:
            return int(cap)
    except Exception:
        pass
    return 64 << 20   # conservative default: v7x per-TensorCore VMEM


def consist_loss(y_f, y_g, consist, reduce="mean"):
    """Pallas implementation of ConsistLoss.forward (returns a scalar, like PyTorch)."""
    assert y_f.shape == y_g.shape, (y_f.shape, y_g.shape)
    N, C, H, W = y_f.shape
    assert C >= 2, "ConsistLoss needs at least 2 channels (flow = channels 1:)"

    HW = H * W
    itemsize = jnp.dtype(y_f.dtype).itemsize
    count = N * (C - 1) * HW                      # MSE mean denominator (flow only)

    # ---- lane-dense per-batch-item layout: row-major view (N, C*HW // L, L) ----
    if W % 128 == 0:
        L = W
    elif (C * HW) % 128 == 0:
        L = 128
    else:
        L = W        # ragged fallback: full-dim last-two block dims (lane-wasteful, correct)
    rows_per_item = (C * HW) // L
    pf = y_f.reshape(N, rows_per_item, L)         # layout-preserving (row-major), no copy
    pg = y_g.reshape(N, rows_per_item, L)

    kind = _device_kind()
    is_v7 = ("v7" in kind) or ("7x" in kind)
    vmem_cap = _vmem_capacity_bytes()

    # ---- block sizing: ~1 MiB (v5e/v6e) / ~2 MiB (v7x) per input per step ----
    per_item_bytes = C * HW * itemsize
    target_bytes = (2 << 20) if is_v7 else (1 << 20)
    nb = max(1, min(N, target_bytes // per_item_bytes))
    # Keep 2 inputs x 2 pipeline buffers under ~half of physical VMEM.
    nb = max(1, min(nb, (vmem_cap // 2) // max(1, 4 * per_item_bytes)))

    total_steps = int(pl.cdiv(N, nb))
    num_partials = 2 if is_v7 else 1              # share HBM streaming across v7x TCs
    num_partials = max(1, min(num_partials, total_steps))
    spp = int(pl.cdiv(total_steps, num_partials))

    # ---- accumulator: fold to (8, L) when rows split cleanly into sublane groups ----
    acc_fold = (rows_per_item % 8 == 0)
    acc_rows = 8 if acc_fold else rows_per_item

    def in_index(p, i):
        # Clamp padded tail steps to the last real block (contribution gated in-kernel).
        return (jnp.minimum(p * spp + i, total_steps - 1), 0, 0)

    blk_shape = (nb, rows_per_item, L)
    blk_bytes = nb * rows_per_item * L * itemsize
    # Deeper buffering only pays when per-step DMAs are small and there are many steps.
    if blk_bytes < (1 << 20) and spp > 2:
        in_spec = pl.BlockSpec(blk_shape, in_index, pipeline_mode=pl.Buffered(3))
        n_buf = 3
    else:
        in_spec = pl.BlockSpec(blk_shape, in_index)
        n_buf = 2

    # VMEM budget: input buffers + f32 temporaries + accumulator + slack; cap for v7x.
    vmem_need = (2 * n_buf * blk_bytes
                 + 3 * nb * rows_per_item * L * 4
                 + acc_rows * max(L, 128) * 4
                 + (2 << 20))
    vmem_limit = int(min(max(vmem_need, 32 << 20), int(0.9 * vmem_cap)))

    kernel = functools.partial(
        _consist_kernel,
        total_steps=total_steps, nb=int(nb), n_items=N,
        skip_elems=HW, acc_fold=acc_fold)

    out = pl.pallas_call(
        kernel,
        out_shape=jax.ShapeDtypeStruct((num_partials, 8, 128), jnp.float32),
        grid_spec=pltpu.PrefetchScalarGridSpec(
            num_scalar_prefetch=0,
            grid=(num_partials, spp),
            in_specs=[in_spec, in_spec],
            out_specs=pl.BlockSpec((1, 8, 128), lambda p, i: (p, 0, 0)),
            scratch_shapes=[pltpu.VMEM((acc_rows, L), jnp.float32)],
        ),
        compiler_params=pltpu.CompilerParams(
            dimension_semantics=("parallel", "arbitrary"),
            vmem_limit_bytes=vmem_limit,
        ),
        cost_estimate=pl.CostEstimate(
            flops=3 * N * C * HW,                        # sub + mul + add per loaded element
            transcendentals=0,
            bytes_accessed=2 * N * C * HW * itemsize     # channel 0 is loaded & masked
            + num_partials * 8 * 128 * 4,
        ),
    )(pf, pg)

    sq_sum = out[:, 0, 0].sum()                          # combine per-core partial sums
    # jnp scaling so a traced `consist` under jit works (count is a static int).
    loss = sq_sum * (jnp.asarray(consist, dtype=jnp.float32) / count)
    # MSELoss already reduced to a scalar; torch.mean of a scalar is the same scalar,
    # so both `reduce` branches of the reference return this value.
    return loss


if __name__ == "__main__":
    # Small shapes consistent with the module's NCHW flow tensors.
    N, C, H, W = 2, 4, 16, 16
    consist = 0.5  # deterministic "args.consist"

    key = jax.random.PRNGKey(0)
    k1, k2 = jax.random.split(key)
    y_f = jax.random.normal(k1, (N, C, H, W), dtype=jnp.float32)
    y_g = jax.random.normal(k2, (N, C, H, W), dtype=jnp.float32)

    result = consist_loss(y_f, y_g, consist, reduce="mean")
    result = jax.block_until_ready(result)

    # Pure-JAX reference check.
    ref = consist * jnp.mean((y_f[:, 1:] - y_g[:, 1:]) ** 2)
    assert jnp.allclose(result, ref, rtol=1e-5, atol=1e-6), (result, ref)

    print("KERNEL_OK")
</pallas_src>

<mosaic_0001>
module attributes {stable_mosaic.version = 11 : i64} {
  func.func @_consist_kernel(%arg0: i32, %arg1: i32, %arg2: memref<2x8x128xf32, #tpu.memory_space<vmem>>, %arg3: memref<2x8x128xf32, #tpu.memory_space<vmem>>, %arg4: memref<1x8x128xf32, #tpu.memory_space<vmem>>, %arg5: memref<8x128xf32, #tpu.memory_space<vmem>>) attributes {dimension_semantics = [#tpu.dimension_semantics<parallel>, #tpu.dimension_semantics<arbitrary>], iteration_bounds = array<i64: 1, 1>, scalar_prefetch = 0 : i64, scratch_operands = 1 : i64, tpu.core_type = #tpu.core_type<tc>, window_params = [{transform_indices = @transform_0, window_bounds = array<i64: 2, 8, 128>}, {transform_indices = @transform_1, window_bounds = array<i64: 2, 8, 128>}, {transform_indices = @transform_2, window_bounds = array<i64: 1, 8, 128>}]} {
    %c0_i32 = arith.constant 0 : i32
    %0 = arith.cmpi eq, %arg1, %c0_i32 : i32
    %1 = arith.extui %0 : i1 to i32
    %c0_i32_0 = arith.constant 0 : i32
    %2 = arith.cmpi ne, %1, %c0_i32_0 : i32
    scf.if %2 {
      %cst = arith.constant 0.000000e+00 : f32
      %11 = vector.broadcast %cst : f32 to vector<8x128xf32>
      %c0 = arith.constant 0 : index
      %c0_5 = arith.constant 0 : index
      %12 = vector.load %arg5[%c0, %c0_5] : memref<8x128xf32, #tpu.memory_space<vmem>>, vector<8x128xf32>
      tpu.vector_store %arg5[%c0, %c0_5], %11 {strides = array<i32>} : memref<8x128xf32, #tpu.memory_space<vmem>>, vector<8x128xf32>,
    } else {
    }
    %c1_i32 = arith.constant 1 : i32
    %3 = arith.muli %arg0, %c1_i32 : i32
    %4 = arith.addi %3, %arg1 : i32
    %c1_i32_1 = arith.constant 1 : i32
    %5 = arith.cmpi slt, %4, %c1_i32_1 : i32
    %6 = arith.extui %5 : i1 to i32
    %c0_i32_2 = arith.constant 0 : i32
    %7 = arith.cmpi ne, %6, %c0_i32_2 : i32
    scf.if %7 {
      %c0 = arith.constant 0 : index
      %c0_5 = arith.constant 0 : index
      %c0_6 = arith.constant 0 : index
      %11 = vector.load %arg2[%c0, %c0_5, %c0_6] : memref<2x8x128xf32, #tpu.memory_space<vmem>>, vector<2x8x128xf32>
      %c0_7 = arith.constant 0 : index
      %c0_8 = arith.constant 0 : index
      %c0_9 = arith.constant 0 : index
      %12 = vector.load %arg3[%c0_7, %c0_8, %c0_9] : memref<2x8x128xf32, #tpu.memory_space<vmem>>, vector<2x8x128xf32>
      %13 = arith.subf %11, %12 : vector<2x8x128xf32>
      %14 = tpu.iota {dimensions = array<i32: 1>} : vector<2x8x128xi32>
      %15 = tpu.iota {dimensions = array<i32: 2>} : vector<2x8x128xi32>
      %16 = tpu.iota {dimensions = array<i32: 0>} : vector<2x8x128xi32>
      %c128_i32 = arith.constant 128 : i32
      %17 = vector.broadcast %c128_i32 : i32 to vector<2x8x128xi32>
      %18 = arith.muli %14, %17 : vector<2x8x128xi32>
      %19 = arith.addi %18, %15 : vector<2x8x128xi32>
      %c256_i32 = arith.constant 256 : i32
      %20 = vector.broadcast %c256_i32 : i32 to vector<2x8x128xi32>
      %21 = arith.cmpi sge, %19, %20 : vector<2x8x128xi32>
      %c2_i32 = arith.constant 2 : i32
      %22 = arith.muli %4, %c2_i32 : i32
      %23 = vector.broadcast %22 : i32 to vector<2x8x128xi32>
      %24 = arith.addi %23, %16 : vector<2x8x128xi32>
      %c2_i32_10 = arith.constant 2 : i32
      %25 = vector.broadcast %c2_i32_10 : i32 to vector<2x8x128xi32>
      %26 = arith.cmpi slt, %24, %25 : vector<2x8x128xi32>
      %27 = arith.andi %21, %26 : vector<2x8x128xi1>
      %28 = arith.mulf %13, %13 : vector<2x8x128xf32>
      %cst = arith.constant 0.000000e+00 : f32
      %29 = vector.broadcast %cst : f32 to vector<2x8x128xf32>
      %30 = arith.select %27, %28, %29 : vector<2x8x128xi1>, vector<2x8x128xf32>
      %c0_11 = arith.constant 0 : index
      %c0_12 = arith.constant 0 : index
      %31 = vector.load %arg5[%c0_11, %c0_12] : memref<8x128xf32, #tpu.memory_space<vmem>>, vector<8x128xf32>
      %cst_13 = arith.constant dense<0.000000e+00> : vector<8x128xf32>
      %32 = vector.multi_reduction <add>, %30, %cst_13 [0] : vector<2x8x128xf32> to vector<8x128xf32>
      %33 = arith.addf %31, %32 : vector<8x128xf32>
      %c0_14 = arith.constant 0 : index
      %c0_15 = arith.constant 0 : index
      %34 = vector.load %arg5[%c0_14, %c0_15] : memref<8x128xf32, #tpu.memory_space<vmem>>, vector<8x128xf32>
      tpu.vector_store %arg5[%c0_14, %c0_15], %33 {strides = array<i32>} : memref<8x128xf32, #tpu.memory_space<vmem>>, vector<8x128xf32>,
    } else {
    }
    %c0_i32_3 = arith.constant 0 : i32
    %8 = arith.cmpi eq, %arg1, %c0_i32_3 : i32
    %9 = arith.extui %8 : i1 to i32
    %c0_i32_4 = arith.constant 0 : i32
    %10 = arith.cmpi ne, %9, %c0_i32_4 : i32
    scf.if %10 {
      %c0 = arith.constant 0 : index
      %c0_5 = arith.constant 0 : index
      %11 = vector.load %arg5[%c0, %c0_5] : memref<8x128xf32, #tpu.memory_space<vmem>>, vector<8x128xf32>
      %12 = vector.shape_cast %11 : vector<8x128xf32> to vector<1x8x128xf32>
      %cst = arith.constant dense<0.000000e+00> : vector<1xf32>
      %13 = vector.multi_reduction <add>, %12, %cst [1, 2] : vector<1x8x128xf32> to vector<1xf32>
      %14 = vector.shape_cast %13 : vector<1xf32> to vector<1x1x1xf32>
      %15 = vector.extract %14[0, 0, 0] : f32 from vector<1x1x1xf32>
      %16 = vector.broadcast %15 : f32 to vector<1x8x128xf32>
      %c0_6 = arith.constant 0 : index
      %c0_7 = arith.constant 0 : index
      %c0_8 = arith.constant 0 : index
      %17 = vector.load %arg4[%c0_6, %c0_7, %c0_8] : memref<1x8x128xf32, #tpu.memory_space<vmem>>, vector<1x8x128xf32>
      tpu.vector_store %arg4[%c0_6, %c0_7, %c0_8], %16 {strides = array<i32>} : memref<1x8x128xf32, #tpu.memory_space<vmem>>, vector<1x8x128xf32>,
    } else {
    }
    return
  }
  func.func @transform_0(%arg0: i32, %arg1: i32) -> (i32, i32, i32) {
    %c1_i32 = arith.constant 1 : i32
    %0 = arith.muli %arg0, %c1_i32 : i32
    %1 = arith.addi %0, %arg1 : i32
    %c0_i32 = arith.constant 0 : i32
    %2 = arith.minsi %1, %c0_i32 : i32
    %c0_i32_0 = arith.constant 0 : i32
    %c0_i32_1 = arith.constant 0 : i32
    %c0_i32_2 = arith.constant 0 : i32
    return %2, %c0_i32_0, %c0_i32_1 : i32, i32, i32
  }
  func.func @transform_1(%arg0: i32, %arg1: i32) -> (i32, i32, i32) {
    %c1_i32 = arith.constant 1 : i32
    %0 = arith.muli %arg0, %c1_i32 : i32
    %1 = arith.addi %0, %arg1 : i32
    %c0_i32 = arith.constant 0 : i32
    %2 = arith.minsi %1, %c0_i32 : i32
    %c0_i32_0 = arith.constant 0 : i32
    %c0_i32_1 = arith.constant 0 : i32
    %c0_i32_2 = arith.constant 0 : i32
    return %2, %c0_i32_0, %c0_i32_1 : i32, i32, i32
  }
  func.func @transform_2(%arg0: i32, %arg1: i32) -> (i32, i32, i32) {
    %c0_i32 = arith.constant 0 : i32
    %c0_i32_0 = arith.constant 0 : i32
    %c0_i32_1 = arith.constant 0 : i32
    return %arg0, %c0_i32, %c0_i32_0 : i32, i32, i32
  }
}

</mosaic_0001>

<llo_original>
// kernel: tpu_custom_call.1
$region0: #{tpu_custom_call.1}
  #allocation0 [shape = 'u32[]', space=smem, size = 0x4, offset = 0x4, fixed_abs, tag = 'smem constant byte address 0x4 - core index']
  #allocation1 [shape = 'u32[144,128]{1,0:T(1,128)}', space=vmem, size = 0x12000, scoped, tag = 'internal scratch']
  #allocation2 [shape = 'f32[8,128]{1,0:T(8,128)}', space=vmem, size = 0x1000, scoped, tag = 'scratch operand']
  %s0 = inlined_call_operand.hbm [shape: f32[2,8,128], index: 0, kind: input, shape index: {}]
  %s1 = inlined_call_operand.hbm [shape: f32[2,8,128], index: 1, kind: input, shape index: {}]
  %s2 = inlined_call_operand.hbm [shape: f32[1,8,128], index: 2, kind: output, shape index: {}]
  %s3 = sld [smem:[#allocation0]]
  $region38: #{tpu_custom_call.1} parent=0
    _
  %s5 = ssub.s32 1, %s3
  %s6 = scalar_select 0, %s5, %s3
  $region1: #{tpu_custom_call.1} parent=0
    #allocation3 [shape = 'u8[8192]{0}', space=vmem, size = 0x2000, scoped, tag = 'input window, operand 0, single buffered']
    #allocation4 [shape = 's32[1]{0}', space=sflag, size = 0x4, scoped, tag = 'scoped memory for tpu_custom_call.1']
    #allocation5 [shape = 's32[1]{0}', space=sflag, size = 0x4, scoped, tag = 'scoped memory for tpu_custom_call.1']
    #allocation6 [shape = 'u8[8192]{0}', space=vmem, size = 0x2000, scoped, tag = 'input window, operand 1, single buffered']
    #allocation7 [shape = 's32[1]{0}', space=sflag, size = 0x4, scoped, tag = 'scoped memory for tpu_custom_call.1']
    #allocation8 [shape = 'u8[4096]{0}', space=vmem, size = 0x1000, scoped, tag = 'output window, operand 0, single buffered']
    %7 = vsyncpa [#allocation4], 0
    %8 = vsyncpa [#allocation7], 0
    %9 = vsyncpa [#allocation5], 0
    // Predicated region
    $region2: #{tpu_custom_call.1} parent=1 // pred_check
      _
    $region3: #{tpu_custom_call.1} parent=1 // pred_check_branch
      %11 = sbr.rel (0) target = $region5
    $region4: #{tpu_custom_call.1} parent=1 // pred_region
      %s12 = sadd.s32 0, 0
      %p13 = scmp.lt.s32.totalorder %s12, 0
      %s14 = scalar_select %p13, %s12, 0
      %s15 = smul.u32 2, %s14
      %s17 = ssub.s32 256, 256
      %18 = vsyncadd [#allocation4], %s17
      %s19 = smul.addr %s15, 128
      %s20 = scalar_lea.hbm %s0, %s19
      %s21 = sshll.u32 [#allocation3], 4
      %s22 = int_to_ptr.vmem [resolvable:$true] %s21
      %27 = dma.hbm_to_vmem [thread:$0]  %s20, 256, %s22, [#allocation4], 128, 128, 8
    $region5: #{tpu_custom_call.1} parent=1 // pred_fallthru
      _
    // Predicated region
    $region6: #{tpu_custom_call.1} parent=1 // pred_check
      _
    $region7: #{tpu_custom_call.1} parent=1 // pred_check_branch
      %29 = sbr.rel (0) target = $region9
    $region8: #{tpu_custom_call.1} parent=1 // pred_region
      %s30 = sadd.s32 0, 0
      %p31 = scmp.lt.s32.totalorder %s30, 0
      %s32 = scalar_select %p31, %s30, 0
      %s33 = smul.u32 2, %s32
      %s35 = ssub.s32 256, 256
      %36 = vsyncadd [#allocation7], %s35
      %s37 = smul.addr %s33, 128
      %s38 = scalar_lea.hbm %s1, %s37
      %s39 = sshll.u32 [#allocation6], 4
      %s40 = int_to_ptr.vmem [resolvable:$true] %s39
      %45 = dma.hbm_to_vmem [thread:$0]  %s38, 256, %s40, [#allocation7], 128, 128, 8
    $region9: #{tpu_custom_call.1} parent=1 // pred_fallthru
      _
    // Predicated region
    $region10: #{tpu_custom_call.1} parent=1 // pred_check
      _
    $region11: #{tpu_custom_call.1} parent=1 // pred_check_branch
      %47 = sbr.rel (0) target = $region13
    $region12: #{tpu_custom_call.1} parent=1 // pred_region
      %48 = dma.done [#allocation4], 256
    $region13: #{tpu_custom_call.1} parent=1 // pred_fallthru
      _
    // Predicated region
    $region14: #{tpu_custom_call.1} parent=1 // pred_check
      _
    $region15: #{tpu_custom_call.1} parent=1 // pred_check_branch
      %50 = sbr.rel (0) target = $region17
    $region16: #{tpu_custom_call.1} parent=1 // pred_region
      %51 = dma.done [#allocation7], 256
    $region17: #{tpu_custom_call.1} parent=1 // pred_fallthru
      _
    %s52 = sadd.s32 0, 0
    %p53 = scmp.lt.s32.totalorder %s52, 0
    %s54 = scalar_select %p53, %s52, 0
    %s55 = smul.u32 2, %s54
    %s56 = sadd.s32 0, 0
    %p57 = scmp.lt.s32.totalorder %s56, 0
    %s58 = scalar_select %p57, %s56, 0
    %s59 = smul.u32 2, %s58
    %p60 = scmp.eq.s32.totalorder 0, 0
    // Predicated region
    $region18: #{tpu_custom_call.1} parent=1 // pred_check
      %p61 = pneg %p60
    $region19: #{tpu_custom_call.1} parent=1 // pred_check_branch
      %63 = sbr.rel (%p61) target = $region21
    $region20: #{tpu_custom_call.1} parent=1 // pred_region
      %64 = vst [vmem:[#allocation2] sm:$0xff] 0.0
    $region21: #{tpu_custom_call.1} parent=1 // pred_fallthru
      _
    %s65 = sadd.s32 0, 0
    %p66 = scmp.lt.s32.totalorder %s65, 1
    // Predicated region
    $region22: #{tpu_custom_call.1} parent=1 // pred_check
      %p67 = pneg %p66
    $region23: #{tpu_custom_call.1} parent=1 // pred_check_branch
      %69 = sbr.rel (%p67) target = $region25
    $region24: #{tpu_custom_call.1} parent=1 // pred_region
      %v70 = vld [vmem:[#allocation3] sm:$0xff]
      %v71 = vld [vmem:[#allocation3 + $0x8] sm:$0xff]
      %v72 = vld [vmem:[#allocation6] sm:$0xff]
      %v73 = vld [vmem:[#allocation6 + $0x8] sm:$0xff]
      %v74 = vsub.f32 %v70, %v72
      %v75 = vsub.f32 %v71, %v73
      %v76 = vlaneseq
      %v77 = vshrl.u32 %v76, 7
      %v78 = vlaneseq
      %v79 = vand.u32 %v78, 127
      %v80 = vmul.u32 %v77, 128
      %v81 = vadd.s32 %v80, %v79
      %vm82 = vcmp.ge.s32.totalorder %v81, 256
      %s83 = smul.u32 %s65, 2
      %v84 = vstv %s83
      %v85 = vadd.s32 %v84, 1
      %vm86 = vcmp.lt.s32.totalorder %v84, 2
      %vm87 = vcmp.lt.s32.totalorder %v85, 2
      %vm88 = vmand %vm82, %vm86
      %vm89 = vmand %vm82, %vm87
      %v90 = vmul.f32 %v74, %v74
      %v91 = vmul.f32 %v75, %v75
      %v92 = vsel %vm88, %v90, 0.0
      %v93 = vsel %vm89, %v91, 0.0
      %v94 = vld [vmem:[#allocation2] sm:$0xff]
      %v95 = vadd.f32 %v92, %v93
      %v96 = vadd.f32 %v94, %v95
      %97 = vst [vmem:[#allocation2] sm:$0xff] %v96
    $region25: #{tpu_custom_call.1} parent=1 // pred_fallthru
      _
    // Predicated region
    $region26: #{tpu_custom_call.1} parent=1 // pred_check
      %p98 = pneg %p60
    $region27: #{tpu_custom_call.1} parent=1 // pred_check_branch
      %100 = sbr.rel (%p98) target = $region29
    $region28: #{tpu_custom_call.1} parent=1 // pred_region
      %v101 = vld [vmem:[#allocation2] sm:$0xff]
      %102 = vadd.xlane.f32.xlu0 %v101
      %v103 = vpop.xlane.xlu0 %102
      %v104 = vrot.slane %v103, 4
      %v105 = vadd.f32 %v103, %v104
      %v106 = vrot.slane %v105, 2
      %v107 = vadd.f32 %v105, %v106
      %v108 = vrot.slane %v107, 1
      %v109 = vadd.f32 %v107, %v108
      %s110 = vtos %v109
      %v111 = vstv %s110
      %112 = vst [vmem:[#allocation8] sm:$0xff] %v111
    $region29: #{tpu_custom_call.1} parent=1 // pred_fallthru
      _
    // Predicated region
    $region30: #{tpu_custom_call.1} parent=1 // pred_check
      _
    $region31: #{tpu_custom_call.1} parent=1 // pred_check_branch
      %114 = sbr.rel (0) target = $region33
    $region32: #{tpu_custom_call.1} parent=1 // pred_region
      %s116 = ssub.s32 128, 128
      %117 = vsyncadd [#allocation5], %s116
      %s119 = sshll.u32 [#allocation8], 4
      %s120 = int_to_ptr.vmem [resolvable:$true] %s119
      %122 = dma.vmem_to_hbm [thread:$0]  %s120, 128, %s2, [#allocation5]
    $region33: #{tpu_custom_call.1} parent=1 // pred_fallthru
      _
    // Predicated region
    $region34: #{tpu_custom_call.1} parent=1 // pred_check
      _
    $region35: #{tpu_custom_call.1} parent=1 // pred_check_branch
      %124 = sbr.rel (0) target = $region37
    $region36: #{tpu_custom_call.1} parent=1 // pred_region
      %125 = dma.done [#allocation5], 128
    $region37: #{tpu_custom_call.1} parent=1 // pred_fallthru
      _
    %126 = vsyncpa [#allocation4], 1
    %127 = vsyncpa [#allocation7], 1
    %128 = vsyncpa [#allocation5], 1

</llo_original>
